<compile_context>
chip_gen: v7x
topology: tpu7x:2x2x1
jax: 0.10.0
libtpu: 0.0.40
codegen_flags: <defaults>
</compile_context>

<pallas_src>
import jax
import jax.numpy as jnp
from jax.experimental import pallas as pl
from jax.experimental.pallas import tpu as pltpu

_TARGET_BLOCK_BYTES = 8 * 1024 * 1024   # per-block DMA size target
_VMEM_LIMIT_BYTES = 48 * 1024 * 1024    # covers 4 x block (double-buffered in + out)
_MIN_GRID_STEPS = 4                     # keep the pipeline busy / shardable across TCs


def _sigmoid_kernel(x_ref, o_ref):
    x = x_ref[...].astype(jnp.float32)
    o_ref[...] = (1.0 / (1.0 + jnp.exp(-x))).astype(o_ref.dtype)


def _sigmoid_flat(x_flat: jax.Array, lane: int) -> jax.Array:
    """Sigmoid of a 1-D array whose length is divisible by `lane`."""
    n = x_flat.shape[0]
    dtype = x_flat.dtype
    itemsize = jnp.dtype(dtype).itemsize
    rows = n // lane
    x2d = x_flat.reshape(rows, lane)

    # ~8 MiB per block, sublane-aligned (multiple of 8 rows).
    tile_rows = max(8, (_TARGET_BLOCK_BYTES // (lane * itemsize)) // 8 * 8)
    if rows >= _MIN_GRID_STEPS * 8:
        # Keep >= _MIN_GRID_STEPS grid steps so DMA-in / compute / DMA-out pipeline
        # and (on v7x) the "parallel" axis has blocks to shard across both cores.
        cap = max(8, (rows // _MIN_GRID_STEPS) // 8 * 8)
        tile_rows = min(tile_rows, cap)
    else:
        tile_rows = rows  # single full-extent block (valid even if rows % 8 != 0)
    grid = (pl.cdiv(rows, tile_rows),)  # ragged last block is masked by Pallas

    out2d = pl.pallas_call(
        _sigmoid_kernel,
        out_shape=jax.ShapeDtypeStruct((rows, lane), dtype),
        grid_spec=pltpu.PrefetchScalarGridSpec(
            num_scalar_prefetch=0,
            grid=grid,
            in_specs=[pl.BlockSpec((tile_rows, lane), lambda i: (i, 0))],
            out_specs=pl.BlockSpec((tile_rows, lane), lambda i: (i, 0)),
        ),
        compiler_params=pltpu.CompilerParams(
            # Independent blocks -> eligible for megacore sharding on multi-TC chips.
            dimension_semantics=("parallel",),
            vmem_limit_bytes=_VMEM_LIMIT_BYTES,
        ),
        cost_estimate=pl.CostEstimate(
            flops=4 * n, transcendentals=n, bytes_accessed=2 * n * itemsize),
    )(x2d)
    return out2d.reshape(n)


def _sigmoid_small(x: jax.Array) -> jax.Array:
    # Tiny (<1024-elem) pieces: plain XLA sigmoid with f32 opmath, like torch.
    return jax.nn.sigmoid(x.astype(jnp.float32)).astype(x.dtype)


def my_sigmoid(x: jax.Array) -> jax.Array:
    """Elementwise sigmoid matching torch.sigmoid semantics (shape & dtype preserved)."""
    orig_shape = x.shape
    n = x.size
    if n == 0:
        return x
    x_flat = jnp.ravel(x)

    # Fast path: widest lane dim that divides n (no pad, no tail handling).
    for w in (1024, 512, 256, 128):
        if n % w == 0:
            return _sigmoid_flat(x_flat, w).reshape(orig_shape)

    # Ragged path: kernel on the 1024-aligned bulk, plain sigmoid on the small tail
    # (avoids full-array jnp.pad + slice and their extra HBM passes).
    lane = 1024
    bulk = (n // lane) * lane
    if bulk == 0:
        return _sigmoid_small(x_flat).reshape(orig_shape)
    head = _sigmoid_flat(x_flat[:bulk], lane)
    tail = _sigmoid_small(x_flat[bulk:])
    return jnp.concatenate([head, tail]).reshape(orig_shape)


if __name__ == "__main__":
    key = jax.random.PRNGKey(0)

    # NCHW-like small input consistent with typical nn.Sigmoid usage.
    x = jax.random.normal(key, (2, 4, 16, 16), dtype=jnp.float32)
    y = jax.block_until_ready(my_sigmoid(x))
    y_ref = jax.nn.sigmoid(x)
    assert y.shape == x.shape and y.dtype == x.dtype
    assert jnp.max(jnp.abs(y - y_ref)) < 1e-6

    # Multi-step pipelined grid path (rows capped so grid has >= 4 steps).
    x1 = jax.random.normal(jax.random.PRNGKey(1), (64, 1024), dtype=jnp.float32)
    y1 = jax.block_until_ready(my_sigmoid(x1))
    assert jnp.max(jnp.abs(y1 - jax.nn.sigmoid(x1))) < 1e-6

    # Ragged (non-128-divisible) path: kernel on the aligned bulk + tiny tail.
    x2 = jax.random.normal(jax.random.PRNGKey(2), (257, 7), dtype=jnp.float32)
    y2 = jax.block_until_ready(my_sigmoid(x2))
    assert y2.shape == x2.shape
    assert jnp.max(jnp.abs(y2 - jax.nn.sigmoid(x2))) < 1e-6

    # Tail-only tiny odd shape (< one lane group).
    x3 = jax.random.normal(jax.random.PRNGKey(3), (3, 5, 7), dtype=jnp.float32)
    y3 = jax.block_until_ready(my_sigmoid(x3))
    assert jnp.max(jnp.abs(y3 - jax.nn.sigmoid(x3))) < 1e-6

    print("KERNEL_OK")
</pallas_src>

<mosaic_0001>
module attributes {stable_mosaic.version = 11 : i64} {
  func.func @_sigmoid_kernel(%arg0: i32, %arg1: memref<2x1024xf32, #tpu.memory_space<vmem>>, %arg2: memref<2x1024xf32, #tpu.memory_space<vmem>>) attributes {dimension_semantics = [#tpu.dimension_semantics<parallel>], iteration_bounds = array<i64: 1>, scalar_prefetch = 0 : i64, scratch_operands = 0 : i64, tpu.core_type = #tpu.core_type<tc>, window_params = [{transform_indices = @transform_0, window_bounds = array<i64: 2, 1024>}, {transform_indices = @transform_1, window_bounds = array<i64: 2, 1024>}]} {
    %c0 = arith.constant 0 : index
    %c0_0 = arith.constant 0 : index
    %0 = vector.load %arg1[%c0, %c0_0] : memref<2x1024xf32, #tpu.memory_space<vmem>>, vector<2x1024xf32>
    %cst = arith.constant 0.000000e+00 : f32
    %1 = vector.broadcast %cst : f32 to vector<2x1024xf32>
    %2 = arith.subf %1, %0 : vector<2x1024xf32>
    %3 = math.exp %2 : vector<2x1024xf32>
    %cst_1 = arith.constant 1.000000e+00 : f32
    %4 = vector.broadcast %cst_1 : f32 to vector<2x1024xf32>
    %5 = arith.addf %4, %3 : vector<2x1024xf32>
    %cst_2 = arith.constant 1.000000e+00 : f32
    %6 = vector.broadcast %cst_2 : f32 to vector<2x1024xf32>
    %7 = arith.divf %6, %5 : vector<2x1024xf32>
    %c0_3 = arith.constant 0 : index
    %c0_4 = arith.constant 0 : index
    %8 = vector.load %arg2[%c0_3, %c0_4] : memref<2x1024xf32, #tpu.memory_space<vmem>>, vector<2x1024xf32>
    tpu.vector_store %arg2[%c0_3, %c0_4], %7 {strides = array<i32>} : memref<2x1024xf32, #tpu.memory_space<vmem>>, vector<2x1024xf32>,
    return
  }
  func.func @transform_0(%arg0: i32) -> (i32, i32) {
    %c0_i32 = arith.constant 0 : i32
    %c0_i32_0 = arith.constant 0 : i32
    return %arg0, %c0_i32 : i32, i32
  }
  func.func @transform_1(%arg0: i32) -> (i32, i32) {
    %c0_i32 = arith.constant 0 : i32
    %c0_i32_0 = arith.constant 0 : i32
    return %arg0, %c0_i32 : i32, i32
  }
}

</mosaic_0001>

<llo_original>
// kernel: tpu_custom_call.1
$region0: #{tpu_custom_call.1}
  #allocation0 [shape = 'u32[]', space=smem, size = 0x4, offset = 0x4, fixed_abs, tag = 'smem constant byte address 0x4 - core index']
  #allocation1 [shape = 'u32[144,128]{1,0:T(1,128)}', space=vmem, size = 0x12000, scoped, tag = 'internal scratch']
  %s0 = inlined_call_operand.hbm [shape: f32[2,1024], index: 0, kind: input, shape index: {}]
  %s1 = inlined_call_operand.hbm [shape: f32[2,1024], index: 1, kind: output, shape index: {}]
  %s2 = sld [smem:[#allocation0]]
  $region18: #{tpu_custom_call.1} parent=0
    _
  %s4 = ssub.s32 1, %s2
  %s5 = scalar_select 0, %s4, %s2
  $region1: #{tpu_custom_call.1} parent=0
    #allocation2 [shape = 'u8[8192]{0}', space=vmem, size = 0x2000, scoped, tag = 'input window, operand 0, single buffered']
    #allocation3 [shape = 's32[1]{0}', space=sflag, size = 0x4, scoped, tag = 'scoped memory for tpu_custom_call.1']
    #allocation4 [shape = 's32[1]{0}', space=sflag, size = 0x4, scoped, tag = 'scoped memory for tpu_custom_call.1']
    #allocation5 [shape = 'u8[8192]{0}', space=vmem, size = 0x2000, scoped, tag = 'output window, operand 0, single buffered']
    %6 = vsyncpa [#allocation3], 0
    %7 = vsyncpa [#allocation4], 0
    // Predicated region
    $region2: #{tpu_custom_call.1} parent=1 // pred_check
      _
    $region3: #{tpu_custom_call.1} parent=1 // pred_check_branch
      %9 = sbr.rel (0) target = $region5
    $region4: #{tpu_custom_call.1} parent=1 // pred_region
      %s11 = ssub.s32 256, 256
      %12 = vsyncadd [#allocation3], %s11
      %s14 = sshll.u32 [#allocation2], 4
      %s15 = int_to_ptr.vmem [resolvable:$true] %s14
      %17 = dma.hbm_to_vmem [thread:$0]  %s0, 256, %s15, [#allocation3]
    $region5: #{tpu_custom_call.1} parent=1 // pred_fallthru
      _
    // Predicated region
    $region6: #{tpu_custom_call.1} parent=1 // pred_check
      _
    $region7: #{tpu_custom_call.1} parent=1 // pred_check_branch
      %19 = sbr.rel (0) target = $region9
    $region8: #{tpu_custom_call.1} parent=1 // pred_region
      %20 = dma.done [#allocation3], 256
    $region9: #{tpu_custom_call.1} parent=1 // pred_fallthru
      _
    %v21 = vld [vmem:[#allocation2] sm:$0xff]
    %v22 = vld [vmem:[#allocation2 + $0x8] sm:$0xff]
    %v23 = vsub.f32 0.0, %v21
    %v24 = vsub.f32 0.0, %v22
    %v25 = vmul.f32 %v23, 1.442695
    %v26 = vpow.pop %v25
    %v27 = vmul.f32 %v24, 1.442695
    %v28 = vpow.pop %v27
    %v29 = vadd.f32 %v26, 1.0
    %v30 = vadd.f32 %v28, 1.0
    %v31 = vrcp.pop %v29
    %v32 = vmul.f32 1.0, %v31
    %v33 = vrcp.pop %v30
    %v34 = vmul.f32 1.0, %v33
    %35 = vst [vmem:[#allocation5] sm:$0xff] %v32
    %36 = vst [vmem:[#allocation5 + $0x8] sm:$0xff] %v34
    // Predicated region
    $region10: #{tpu_custom_call.1} parent=1 // pred_check
      _
    $region11: #{tpu_custom_call.1} parent=1 // pred_check_branch
      %38 = sbr.rel (0) target = $region13
    $region12: #{tpu_custom_call.1} parent=1 // pred_region
      %s40 = ssub.s32 256, 256
      %41 = vsyncadd [#allocation4], %s40
      %s43 = sshll.u32 [#allocation5], 4
      %s44 = int_to_ptr.vmem [resolvable:$true] %s43
      %46 = dma.vmem_to_hbm [thread:$0]  %s44, 256, %s1, [#allocation4]
    $region13: #{tpu_custom_call.1} parent=1 // pred_fallthru
      _
    // Predicated region
    $region14: #{tpu_custom_call.1} parent=1 // pred_check
      _
    $region15: #{tpu_custom_call.1} parent=1 // pred_check_branch
      %48 = sbr.rel (0) target = $region17
    $region16: #{tpu_custom_call.1} parent=1 // pred_region
      %49 = dma.done [#allocation4], 256
    $region17: #{tpu_custom_call.1} parent=1 // pred_fallthru
      _
    %50 = vsyncpa [#allocation3], 1
    %51 = vsyncpa [#allocation4], 1

</llo_original>
